<compile_context>
chip_gen: v6e
topology: v6e:2x2x1
jax: 0.10.0
libtpu: 0.0.40
codegen_flags: <defaults>
</compile_context>

<pallas_src>
import numpy as np
import jax
import jax.numpy as jnp
from jax.experimental import pallas as pl
from jax.experimental.pallas import tpu as pltpu

LANE = 128
MAX_TB = 2048          # lanes per grid step (512-4096 range per review; VMEM-trivial)


# ----------------------------------------------------------------------------- glue
def _skew(w):
    z = jnp.zeros((), w.dtype)
    return jnp.stack([
        jnp.stack([z, -w[2], w[1]]),
        jnp.stack([w[2], z, -w[0]]),
        jnp.stack([-w[1], w[0], z]),
    ])


def _exp_coeffs(w, theta):
    """exp([xi]*theta) = [[Re, pe],[0,0,0,1]], Re = I + a1*W + a2*W^2,
       pe = (g0*I + g1*W + g2*W^2) @ v, with W = skew(w)."""
    n = jnp.sqrt(jnp.sum(w * w))
    small = n < 1e-8
    safe_n = jnp.where(small, 1.0, n)
    phi = safe_n * theta
    s, c = jnp.sin(phi), jnp.cos(phi)
    a1 = jnp.where(small, theta, s / safe_n)
    a2 = jnp.where(small, 0.5 * theta ** 2, (1.0 - c) / (safe_n ** 2))
    g0 = theta
    g1 = a2
    g2 = jnp.where(small, theta ** 3 / 6.0, (phi - s) / (safe_n ** 3))
    return a1, a2, g0, g1, g2


# ----------------------------------------------------------------------------- kernel
def twist_kernel(const_ref, tin_ref, coef_ref, o_ref):
    # const_ref : SMEM (60,)    packed scalar constants (2 joints x 30)
    # tin_ref   : VMEM (16, TB) flattened 4x4 transforms, batch on lanes
    # coef_ref  : VMEM (10, TB) per-batch srodrigues coefficients
    # o_ref     : VMEM (28, TB) fused [rev_twist | pris_twist | T_out]
    Tfull = tin_ref[...]
    Cfull = coef_ref[...]

    T = [Tfull[k:k + 1, :] for k in range(16)]                       # (1, TB) each
    a1r, a2r, g0r, g1r, g2r = [Cfull[k:k + 1, :] for k in range(5)]
    a1p, a2p, g0p, g1p, g2p = [Cfull[k:k + 1, :] for k in range(5, 10)]

    def c(k):
        return const_ref[k]

    def joint_consts(off):
        w = [c(off + k) for k in range(3)]
        v = [c(off + 3 + k) for k in range(3)]
        Wv = [c(off + 6 + k) for k in range(3)]
        W2v = [c(off + 9 + k) for k in range(3)]
        W = [[c(off + 12 + 3 * i + j) for j in range(3)] for i in range(3)]
        W2 = [[c(off + 21 + 3 * i + j) for j in range(3)] for i in range(3)]
        return w, v, Wv, W2v, W, W2

    def adj_inv(T, w, v):
        # inv_x(t2x(T)) @ [w; v]  ->  (R^T w, R^T (v + w x p)), batched over lanes
        p = [T[4 * i + 3] for i in range(3)]
        cr = [w[1] * p[2] - w[2] * p[1],
              w[2] * p[0] - w[0] * p[2],
              w[0] * p[1] - w[1] * p[0]]
        lin_in = [v[i] + cr[i] for i in range(3)]
        ang = [T[0 + j] * w[0] + T[4 + j] * w[1] + T[8 + j] * w[2]
               for j in range(3)]
        lin = [T[0 + j] * lin_in[0] + T[4 + j] * lin_in[1] + T[8 + j] * lin_in[2]
               for j in range(3)]
        return ang, lin

    def apply_exp(T, v, Wv, W2v, W, W2, a1, a2, g0, g1, g2):
        # T @ [[Re, pe],[0,0,0,1]]  — fully unrolled lane-vector FMAs (no MXU)
        Re = []
        for j in range(3):
            rrow = []
            for k in range(3):
                e = a1 * W[j][k] + a2 * W2[j][k]
                if j == k:
                    e = e + 1.0
                rrow.append(e)
            Re.append(rrow)
        pe = [g0 * v[j] + g1 * Wv[j] + g2 * W2v[j] for j in range(3)]
        newT = [None] * 16
        for i in range(4):
            r0, r1, r2, r3 = T[4 * i + 0], T[4 * i + 1], T[4 * i + 2], T[4 * i + 3]
            for k in range(3):
                newT[4 * i + k] = r0 * Re[0][k] + r1 * Re[1][k] + r2 * Re[2][k]
            newT[4 * i + 3] = r0 * pe[0] + r1 * pe[1] + r2 * pe[2] + r3
        return newT

    wr, vr, Wvr, W2vr, Wr, W2r = joint_consts(0)
    wp, vp, Wvp, W2vp, Wp, W2p = joint_consts(30)

    # ---- revolute joint -------------------------------------------------------
    ang_r, lin_r = adj_inv(T, wr, vr)
    # make_revolute (expression kept verbatim from the PyTorch code, elementwise)
    ortho = [(1.0 - ang_r[j] * lin_r[j] / ang_r[j] * ang_r[j]) * lin_r[j]
             for j in range(3)]
    T1 = apply_exp(T, vr, Wvr, W2vr, Wr, W2r, a1r, a2r, g0r, g1r, g2r)

    # ---- prismatic joint ------------------------------------------------------
    ang_p, lin_p = adj_inv(T1, wp, vp)
    zero = jnp.zeros_like(lin_p[0])
    T2 = apply_exp(T1, vp, Wvp, W2vp, Wp, W2p, a1p, a2p, g0p, g1p, g2p)

    # single fused lane-dense store (28, TB)
    o_ref[...] = jnp.concatenate(
        ang_r + ortho + [zero, zero, zero] + lin_p + T2, axis=0)


# ----------------------------------------------------------------------------- wrapper
def twist_forward(out, q, revolute, prismatic):
    f32 = jnp.float32
    out = out.astype(f32)
    q = q.astype(f32)
    revolute = revolute.astype(f32)
    prismatic = prismatic.astype(f32)
    B = out.shape[0]

    TB = min(MAX_TB, ((B + LANE - 1) // LANE) * LANE)
    nsteps = (B + TB - 1) // TB
    Bp = nsteps * TB

    # SoA layout: batch on lanes
    tin = out.reshape(B, 16).T                                   # (16, B)
    w_r, v_r = revolute[:3], revolute[3:]
    w_p, v_p = prismatic[:3], prismatic[3:]
    cr = _exp_coeffs(w_r, q[:, 0])
    cp = _exp_coeffs(w_p, q[:, 1])
    coef = jnp.stack(list(cr) + list(cp), axis=0)                # (10, B)

    if Bp != B:
        pad = Bp - B
        eye_cols = jnp.tile(jnp.eye(4, dtype=f32).reshape(16, 1), (1, pad))
        tin = jnp.concatenate([tin, eye_cols], axis=1)
        coef = jnp.concatenate([coef, jnp.zeros((10, pad), f32)], axis=1)

    # packed scalar constants: per joint [w, v, W@v, W^2@v, W(9), W^2(9)] = 30
    def joint_pack(w, v):
        W = _skew(w)
        W2 = W @ W
        return jnp.concatenate([w, v, W @ v, W2 @ v, W.reshape(-1), W2.reshape(-1)])

    const = jnp.concatenate(
        [joint_pack(w_r, v_r), joint_pack(w_p, v_p)]).astype(f32)   # (60,)

    slab = pl.pallas_call(
        twist_kernel,
        out_shape=jax.ShapeDtypeStruct((28, Bp), f32),
        grid=(nsteps,),
        in_specs=[
            pl.BlockSpec(memory_space=pltpu.MemorySpace.SMEM),      # const (60,)
            pl.BlockSpec((16, TB), lambda i: (0, i)),               # transforms
            pl.BlockSpec((10, TB), lambda i: (0, i)),               # coefficients
        ],
        out_specs=pl.BlockSpec((28, TB), lambda i: (0, i)),
        compiler_params=pltpu.CompilerParams(
            dimension_semantics=("parallel",)),
    )(const, tin, coef)

    rev_tw = slab[0:6, :B].T
    pris_tw = slab[6:12, :B].T
    out_new = slab[12:28, :B].T.reshape(B, 4, 4)
    return rev_tw, pris_tw, out_new


# ----------------------------------------------------------------------------- pure-JAX reference
def ref_forward(out, q, revolute, prismatic):
    def srodrigues(xi, theta):
        w, v = xi[:3], xi[3:]
        W = _skew(w); W2 = W @ W
        a1, a2, g0, g1, g2 = _exp_coeffs(w, theta)
        I = jnp.eye(3, dtype=out.dtype)
        Re = I[None] + a1[:, None, None] * W + a2[:, None, None] * W2
        G = g0[:, None, None] * I + g1[:, None, None] * W + g2[:, None, None] * W2
        pe = jnp.einsum('bij,j->bi', G, v)
        top = jnp.concatenate([Re, pe[:, :, None]], axis=2)
        bot = jnp.broadcast_to(jnp.array([[[0., 0., 0., 1.]]], dtype=out.dtype),
                               (theta.shape[0], 1, 4))
        return jnp.concatenate([top, bot], axis=1)

    def adj_inv_twist(T, xi):
        R = T[:, :3, :3]; p = T[:, :3, 3]
        w, v = xi[:3], xi[3:]
        ang = jnp.einsum('bkj,k->bj', R, w)                               # R^T w
        lin = jnp.einsum('bkj,bk->bj', R, v[None, :] - jnp.cross(p, w[None, :]))
        return ang, lin

    ang_r, lin_r = adj_inv_twist(out, revolute)
    ortho = (1.0 - ang_r * lin_r / ang_r * ang_r) * lin_r
    rev_tw = jnp.concatenate([ang_r, ortho], axis=1)
    out1 = jnp.matmul(out, srodrigues(revolute, q[:, 0]))
    ang_p, lin_p = adj_inv_twist(out1, prismatic)
    pris_tw = jnp.concatenate([jnp.zeros_like(ang_p), lin_p], axis=1)
    out2 = jnp.matmul(out1, srodrigues(prismatic, q[:, 1]))
    return rev_tw, pris_tw, out2


# ----------------------------------------------------------------------------- main
if __name__ == "__main__":
    f32 = jnp.float32
    key = jax.random.PRNGKey(0)
    ks = jax.random.split(key, 8)

    # Parameters (deterministic, uniform(-1, 1) like the PyTorch __init__)
    revolute = jax.random.uniform(ks[0], (6,), f32, -1.0, 1.0)
    prismatic = jax.random.uniform(ks[1], (6,), f32, -1.0, 1.0)
    position = jax.random.uniform(ks[2], (1, 3), f32, -1.0, 1.0)      # unused in forward
    orientation = jax.random.uniform(ks[3], (1, 3), f32, -1.0, 1.0)   # unused in forward

    B = 2
    # Example inputs: batch of rigid transforms (rotation about z + random translation)
    ang = jax.random.uniform(ks[4], (B,), f32, -1.0, 1.0)
    trans = jax.random.uniform(ks[5], (B, 3), f32, -1.0, 1.0)
    ca, sa = jnp.cos(ang), jnp.sin(ang)
    z = jnp.zeros_like(ca); o = jnp.ones_like(ca)
    out = jnp.stack([
        jnp.stack([ca, -sa, z, trans[:, 0]], axis=1),
        jnp.stack([sa,  ca, z, trans[:, 1]], axis=1),
        jnp.stack([z,   z,  o, trans[:, 2]], axis=1),
        jnp.stack([z,   z,  z, o], axis=1),
    ], axis=1)                                                         # (B, 4, 4)
    q = jax.random.uniform(ks[6], (B, 2), f32, -1.0, 1.0)              # (B, 2)

    rev_tw, pris_tw, out_new = jax.block_until_ready(
        jax.jit(twist_forward)(out, q, revolute, prismatic))

    rev_r, pris_r, out_r = ref_forward(out, q, revolute, prismatic)
    np.testing.assert_allclose(np.asarray(rev_tw), np.asarray(rev_r), rtol=1e-4, atol=1e-5)
    np.testing.assert_allclose(np.asarray(pris_tw), np.asarray(pris_r), rtol=1e-4, atol=1e-5)
    np.testing.assert_allclose(np.asarray(out_new), np.asarray(out_r), rtol=1e-4, atol=1e-5)

    print("KERNEL_OK")
</pallas_src>

<mosaic_0001>
module attributes {stable_mosaic.version = 11 : i64} {
  func.func @twist_kernel(%arg0: i32, %arg1: memref<60xf32, #tpu.memory_space<smem>>, %arg2: memref<16x128xf32, #tpu.memory_space<vmem>>, %arg3: memref<10x128xf32, #tpu.memory_space<vmem>>, %arg4: memref<28x128xf32, #tpu.memory_space<vmem>>) attributes {dimension_semantics = [#tpu.dimension_semantics<parallel>], iteration_bounds = array<i64: 1>, scalar_prefetch = 0 : i64, scratch_operands = 0 : i64, tpu.core_type = #tpu.core_type<tc>, window_params = [{transform_indices = @transform_0, window_bounds = array<i64: 60>}, {transform_indices = @transform_1, window_bounds = array<i64: 16, 128>}, {transform_indices = @transform_2, window_bounds = array<i64: 10, 128>}, {transform_indices = @transform_3, window_bounds = array<i64: 28, 128>}]} {
    %c0 = arith.constant 0 : index
    %c0_0 = arith.constant 0 : index
    %0 = vector.load %arg2[%c0, %c0_0] : memref<16x128xf32, #tpu.memory_space<vmem>>, vector<16x128xf32>
    %c0_1 = arith.constant 0 : index
    %c0_2 = arith.constant 0 : index
    %1 = vector.load %arg3[%c0_1, %c0_2] : memref<10x128xf32, #tpu.memory_space<vmem>>, vector<10x128xf32>
    %2 = vector.extract_strided_slice %0 {offsets = [0, 0], sizes = [1, 128], strides = [1, 1]} : vector<16x128xf32> to vector<1x128xf32>
    %3 = vector.extract_strided_slice %0 {offsets = [1, 0], sizes = [1, 128], strides = [1, 1]} : vector<16x128xf32> to vector<1x128xf32>
    %4 = vector.extract_strided_slice %0 {offsets = [2, 0], sizes = [1, 128], strides = [1, 1]} : vector<16x128xf32> to vector<1x128xf32>
    %5 = vector.extract_strided_slice %0 {offsets = [3, 0], sizes = [1, 128], strides = [1, 1]} : vector<16x128xf32> to vector<1x128xf32>
    %6 = vector.extract_strided_slice %0 {offsets = [4, 0], sizes = [1, 128], strides = [1, 1]} : vector<16x128xf32> to vector<1x128xf32>
    %7 = vector.extract_strided_slice %0 {offsets = [5, 0], sizes = [1, 128], strides = [1, 1]} : vector<16x128xf32> to vector<1x128xf32>
    %8 = vector.extract_strided_slice %0 {offsets = [6, 0], sizes = [1, 128], strides = [1, 1]} : vector<16x128xf32> to vector<1x128xf32>
    %9 = vector.extract_strided_slice %0 {offsets = [7, 0], sizes = [1, 128], strides = [1, 1]} : vector<16x128xf32> to vector<1x128xf32>
    %10 = vector.extract_strided_slice %0 {offsets = [8, 0], sizes = [1, 128], strides = [1, 1]} : vector<16x128xf32> to vector<1x128xf32>
    %11 = vector.extract_strided_slice %0 {offsets = [9, 0], sizes = [1, 128], strides = [1, 1]} : vector<16x128xf32> to vector<1x128xf32>
    %12 = vector.extract_strided_slice %0 {offsets = [10, 0], sizes = [1, 128], strides = [1, 1]} : vector<16x128xf32> to vector<1x128xf32>
    %13 = vector.extract_strided_slice %0 {offsets = [11, 0], sizes = [1, 128], strides = [1, 1]} : vector<16x128xf32> to vector<1x128xf32>
    %14 = vector.extract_strided_slice %0 {offsets = [12, 0], sizes = [1, 128], strides = [1, 1]} : vector<16x128xf32> to vector<1x128xf32>
    %15 = vector.extract_strided_slice %0 {offsets = [13, 0], sizes = [1, 128], strides = [1, 1]} : vector<16x128xf32> to vector<1x128xf32>
    %16 = vector.extract_strided_slice %0 {offsets = [14, 0], sizes = [1, 128], strides = [1, 1]} : vector<16x128xf32> to vector<1x128xf32>
    %17 = vector.extract_strided_slice %0 {offsets = [15, 0], sizes = [1, 128], strides = [1, 1]} : vector<16x128xf32> to vector<1x128xf32>
    %18 = vector.extract_strided_slice %1 {offsets = [0, 0], sizes = [1, 128], strides = [1, 1]} : vector<10x128xf32> to vector<1x128xf32>
    %19 = vector.extract_strided_slice %1 {offsets = [1, 0], sizes = [1, 128], strides = [1, 1]} : vector<10x128xf32> to vector<1x128xf32>
    %20 = vector.extract_strided_slice %1 {offsets = [2, 0], sizes = [1, 128], strides = [1, 1]} : vector<10x128xf32> to vector<1x128xf32>
    %21 = vector.extract_strided_slice %1 {offsets = [3, 0], sizes = [1, 128], strides = [1, 1]} : vector<10x128xf32> to vector<1x128xf32>
    %22 = vector.extract_strided_slice %1 {offsets = [4, 0], sizes = [1, 128], strides = [1, 1]} : vector<10x128xf32> to vector<1x128xf32>
    %23 = vector.extract_strided_slice %1 {offsets = [5, 0], sizes = [1, 128], strides = [1, 1]} : vector<10x128xf32> to vector<1x128xf32>
    %24 = vector.extract_strided_slice %1 {offsets = [6, 0], sizes = [1, 128], strides = [1, 1]} : vector<10x128xf32> to vector<1x128xf32>
    %25 = vector.extract_strided_slice %1 {offsets = [7, 0], sizes = [1, 128], strides = [1, 1]} : vector<10x128xf32> to vector<1x128xf32>
    %26 = vector.extract_strided_slice %1 {offsets = [8, 0], sizes = [1, 128], strides = [1, 1]} : vector<10x128xf32> to vector<1x128xf32>
    %27 = vector.extract_strided_slice %1 {offsets = [9, 0], sizes = [1, 128], strides = [1, 1]} : vector<10x128xf32> to vector<1x128xf32>
    %c0_3 = arith.constant 0 : index
    %28 = memref.load %arg1[%c0_3] : memref<60xf32, #tpu.memory_space<smem>>
    %c1 = arith.constant 1 : index
    %29 = memref.load %arg1[%c1] : memref<60xf32, #tpu.memory_space<smem>>
    %c2 = arith.constant 2 : index
    %30 = memref.load %arg1[%c2] : memref<60xf32, #tpu.memory_space<smem>>
    %c3 = arith.constant 3 : index
    %31 = memref.load %arg1[%c3] : memref<60xf32, #tpu.memory_space<smem>>
    %c4 = arith.constant 4 : index
    %32 = memref.load %arg1[%c4] : memref<60xf32, #tpu.memory_space<smem>>
    %c5 = arith.constant 5 : index
    %33 = memref.load %arg1[%c5] : memref<60xf32, #tpu.memory_space<smem>>
    %c6 = arith.constant 6 : index
    %34 = memref.load %arg1[%c6] : memref<60xf32, #tpu.memory_space<smem>>
    %c7 = arith.constant 7 : index
    %35 = memref.load %arg1[%c7] : memref<60xf32, #tpu.memory_space<smem>>
    %c8 = arith.constant 8 : index
    %36 = memref.load %arg1[%c8] : memref<60xf32, #tpu.memory_space<smem>>
    %c9 = arith.constant 9 : index
    %37 = memref.load %arg1[%c9] : memref<60xf32, #tpu.memory_space<smem>>
    %c10 = arith.constant 10 : index
    %38 = memref.load %arg1[%c10] : memref<60xf32, #tpu.memory_space<smem>>
    %c11 = arith.constant 11 : index
    %39 = memref.load %arg1[%c11] : memref<60xf32, #tpu.memory_space<smem>>
    %c12 = arith.constant 12 : index
    %40 = memref.load %arg1[%c12] : memref<60xf32, #tpu.memory_space<smem>>
    %c13 = arith.constant 13 : index
    %41 = memref.load %arg1[%c13] : memref<60xf32, #tpu.memory_space<smem>>
    %c14 = arith.constant 14 : index
    %42 = memref.load %arg1[%c14] : memref<60xf32, #tpu.memory_space<smem>>
    %c15 = arith.constant 15 : index
    %43 = memref.load %arg1[%c15] : memref<60xf32, #tpu.memory_space<smem>>
    %c16 = arith.constant 16 : index
    %44 = memref.load %arg1[%c16] : memref<60xf32, #tpu.memory_space<smem>>
    %c17 = arith.constant 17 : index
    %45 = memref.load %arg1[%c17] : memref<60xf32, #tpu.memory_space<smem>>
    %c18 = arith.constant 18 : index
    %46 = memref.load %arg1[%c18] : memref<60xf32, #tpu.memory_space<smem>>
    %c19 = arith.constant 19 : index
    %47 = memref.load %arg1[%c19] : memref<60xf32, #tpu.memory_space<smem>>
    %c20 = arith.constant 20 : index
    %48 = memref.load %arg1[%c20] : memref<60xf32, #tpu.memory_space<smem>>
    %c21 = arith.constant 21 : index
    %49 = memref.load %arg1[%c21] : memref<60xf32, #tpu.memory_space<smem>>
    %c22 = arith.constant 22 : index
    %50 = memref.load %arg1[%c22] : memref<60xf32, #tpu.memory_space<smem>>
    %c23 = arith.constant 23 : index
    %51 = memref.load %arg1[%c23] : memref<60xf32, #tpu.memory_space<smem>>
    %c24 = arith.constant 24 : index
    %52 = memref.load %arg1[%c24] : memref<60xf32, #tpu.memory_space<smem>>
    %c25 = arith.constant 25 : index
    %53 = memref.load %arg1[%c25] : memref<60xf32, #tpu.memory_space<smem>>
    %c26 = arith.constant 26 : index
    %54 = memref.load %arg1[%c26] : memref<60xf32, #tpu.memory_space<smem>>
    %c27 = arith.constant 27 : index
    %55 = memref.load %arg1[%c27] : memref<60xf32, #tpu.memory_space<smem>>
    %c28 = arith.constant 28 : index
    %56 = memref.load %arg1[%c28] : memref<60xf32, #tpu.memory_space<smem>>
    %c29 = arith.constant 29 : index
    %57 = memref.load %arg1[%c29] : memref<60xf32, #tpu.memory_space<smem>>
    %c30 = arith.constant 30 : index
    %58 = memref.load %arg1[%c30] : memref<60xf32, #tpu.memory_space<smem>>
    %c31 = arith.constant 31 : index
    %59 = memref.load %arg1[%c31] : memref<60xf32, #tpu.memory_space<smem>>
    %c32 = arith.constant 32 : index
    %60 = memref.load %arg1[%c32] : memref<60xf32, #tpu.memory_space<smem>>
    %c33 = arith.constant 33 : index
    %61 = memref.load %arg1[%c33] : memref<60xf32, #tpu.memory_space<smem>>
    %c34 = arith.constant 34 : index
    %62 = memref.load %arg1[%c34] : memref<60xf32, #tpu.memory_space<smem>>
    %c35 = arith.constant 35 : index
    %63 = memref.load %arg1[%c35] : memref<60xf32, #tpu.memory_space<smem>>
    %c36 = arith.constant 36 : index
    %64 = memref.load %arg1[%c36] : memref<60xf32, #tpu.memory_space<smem>>
    %c37 = arith.constant 37 : index
    %65 = memref.load %arg1[%c37] : memref<60xf32, #tpu.memory_space<smem>>
    %c38 = arith.constant 38 : index
    %66 = memref.load %arg1[%c38] : memref<60xf32, #tpu.memory_space<smem>>
    %c39 = arith.constant 39 : index
    %67 = memref.load %arg1[%c39] : memref<60xf32, #tpu.memory_space<smem>>
    %c40 = arith.constant 40 : index
    %68 = memref.load %arg1[%c40] : memref<60xf32, #tpu.memory_space<smem>>
    %c41 = arith.constant 41 : index
    %69 = memref.load %arg1[%c41] : memref<60xf32, #tpu.memory_space<smem>>
    %c42 = arith.constant 42 : index
    %70 = memref.load %arg1[%c42] : memref<60xf32, #tpu.memory_space<smem>>
    %c43 = arith.constant 43 : index
    %71 = memref.load %arg1[%c43] : memref<60xf32, #tpu.memory_space<smem>>
    %c44 = arith.constant 44 : index
    %72 = memref.load %arg1[%c44] : memref<60xf32, #tpu.memory_space<smem>>
    %c45 = arith.constant 45 : index
    %73 = memref.load %arg1[%c45] : memref<60xf32, #tpu.memory_space<smem>>
    %c46 = arith.constant 46 : index
    %74 = memref.load %arg1[%c46] : memref<60xf32, #tpu.memory_space<smem>>
    %c47 = arith.constant 47 : index
    %75 = memref.load %arg1[%c47] : memref<60xf32, #tpu.memory_space<smem>>
    %c48 = arith.constant 48 : index
    %76 = memref.load %arg1[%c48] : memref<60xf32, #tpu.memory_space<smem>>
    %c49 = arith.constant 49 : index
    %77 = memref.load %arg1[%c49] : memref<60xf32, #tpu.memory_space<smem>>
    %c50 = arith.constant 50 : index
    %78 = memref.load %arg1[%c50] : memref<60xf32, #tpu.memory_space<smem>>
    %c51 = arith.constant 51 : index
    %79 = memref.load %arg1[%c51] : memref<60xf32, #tpu.memory_space<smem>>
    %c52 = arith.constant 52 : index
    %80 = memref.load %arg1[%c52] : memref<60xf32, #tpu.memory_space<smem>>
    %c53 = arith.constant 53 : index
    %81 = memref.load %arg1[%c53] : memref<60xf32, #tpu.memory_space<smem>>
    %c54 = arith.constant 54 : index
    %82 = memref.load %arg1[%c54] : memref<60xf32, #tpu.memory_space<smem>>
    %c55 = arith.constant 55 : index
    %83 = memref.load %arg1[%c55] : memref<60xf32, #tpu.memory_space<smem>>
    %c56 = arith.constant 56 : index
    %84 = memref.load %arg1[%c56] : memref<60xf32, #tpu.memory_space<smem>>
    %c57 = arith.constant 57 : index
    %85 = memref.load %arg1[%c57] : memref<60xf32, #tpu.memory_space<smem>>
    %c58 = arith.constant 58 : index
    %86 = memref.load %arg1[%c58] : memref<60xf32, #tpu.memory_space<smem>>
    %c59 = arith.constant 59 : index
    %87 = memref.load %arg1[%c59] : memref<60xf32, #tpu.memory_space<smem>>
    %88 = vector.broadcast %29 : f32 to vector<1x128xf32>
    %89 = arith.mulf %88, %13 : vector<1x128xf32>
    %90 = vector.broadcast %30 : f32 to vector<1x128xf32>
    %91 = arith.mulf %90, %9 : vector<1x128xf32>
    %92 = arith.subf %89, %91 : vector<1x128xf32>
    %93 = vector.broadcast %30 : f32 to vector<1x128xf32>
    %94 = arith.mulf %93, %5 : vector<1x128xf32>
    %95 = vector.broadcast %28 : f32 to vector<1x128xf32>
    %96 = arith.mulf %95, %13 : vector<1x128xf32>
    %97 = arith.subf %94, %96 : vector<1x128xf32>
    %98 = vector.broadcast %28 : f32 to vector<1x128xf32>
    %99 = arith.mulf %98, %9 : vector<1x128xf32>
    %100 = vector.broadcast %29 : f32 to vector<1x128xf32>
    %101 = arith.mulf %100, %5 : vector<1x128xf32>
    %102 = arith.subf %99, %101 : vector<1x128xf32>
    %103 = vector.broadcast %31 : f32 to vector<1x128xf32>
    %104 = arith.addf %103, %92 : vector<1x128xf32>
    %105 = vector.broadcast %32 : f32 to vector<1x128xf32>
    %106 = arith.addf %105, %97 : vector<1x128xf32>
    %107 = vector.broadcast %33 : f32 to vector<1x128xf32>
    %108 = arith.addf %107, %102 : vector<1x128xf32>
    %109 = vector.broadcast %28 : f32 to vector<1x128xf32>
    %110 = arith.mulf %2, %109 : vector<1x128xf32>
    %111 = vector.broadcast %29 : f32 to vector<1x128xf32>
    %112 = arith.mulf %6, %111 : vector<1x128xf32>
    %113 = arith.addf %110, %112 : vector<1x128xf32>
    %114 = vector.broadcast %30 : f32 to vector<1x128xf32>
    %115 = arith.mulf %10, %114 : vector<1x128xf32>
    %116 = arith.addf %113, %115 : vector<1x128xf32>
    %117 = vector.broadcast %28 : f32 to vector<1x128xf32>
    %118 = arith.mulf %3, %117 : vector<1x128xf32>
    %119 = vector.broadcast %29 : f32 to vector<1x128xf32>
    %120 = arith.mulf %7, %119 : vector<1x128xf32>
    %121 = arith.addf %118, %120 : vector<1x128xf32>
    %122 = vector.broadcast %30 : f32 to vector<1x128xf32>
    %123 = arith.mulf %11, %122 : vector<1x128xf32>
    %124 = arith.addf %121, %123 : vector<1x128xf32>
    %125 = vector.broadcast %28 : f32 to vector<1x128xf32>
    %126 = arith.mulf %4, %125 : vector<1x128xf32>
    %127 = vector.broadcast %29 : f32 to vector<1x128xf32>
    %128 = arith.mulf %8, %127 : vector<1x128xf32>
    %129 = arith.addf %126, %128 : vector<1x128xf32>
    %130 = vector.broadcast %30 : f32 to vector<1x128xf32>
    %131 = arith.mulf %12, %130 : vector<1x128xf32>
    %132 = arith.addf %129, %131 : vector<1x128xf32>
    %133 = arith.mulf %2, %104 : vector<1x128xf32>
    %134 = arith.mulf %6, %106 : vector<1x128xf32>
    %135 = arith.addf %133, %134 : vector<1x128xf32>
    %136 = arith.mulf %10, %108 : vector<1x128xf32>
    %137 = arith.addf %135, %136 : vector<1x128xf32>
    %138 = arith.mulf %3, %104 : vector<1x128xf32>
    %139 = arith.mulf %7, %106 : vector<1x128xf32>
    %140 = arith.addf %138, %139 : vector<1x128xf32>
    %141 = arith.mulf %11, %108 : vector<1x128xf32>
    %142 = arith.addf %140, %141 : vector<1x128xf32>
    %143 = arith.mulf %4, %104 : vector<1x128xf32>
    %144 = arith.mulf %8, %106 : vector<1x128xf32>
    %145 = arith.addf %143, %144 : vector<1x128xf32>
    %146 = arith.mulf %12, %108 : vector<1x128xf32>
    %147 = arith.addf %145, %146 : vector<1x128xf32>
    %148 = arith.mulf %116, %137 : vector<1x128xf32>
    %149 = arith.divf %148, %116 : vector<1x128xf32>
    %150 = arith.mulf %149, %116 : vector<1x128xf32>
    %cst = arith.constant 1.000000e+00 : f32
    %151 = vector.broadcast %cst : f32 to vector<1x128xf32>
    %152 = arith.subf %151, %150 : vector<1x128xf32>
    %153 = arith.mulf %152, %137 : vector<1x128xf32>
    %154 = arith.mulf %124, %142 : vector<1x128xf32>
    %155 = arith.divf %154, %124 : vector<1x128xf32>
    %156 = arith.mulf %155, %124 : vector<1x128xf32>
    %cst_4 = arith.constant 1.000000e+00 : f32
    %157 = vector.broadcast %cst_4 : f32 to vector<1x128xf32>
    %158 = arith.subf %157, %156 : vector<1x128xf32>
    %159 = arith.mulf %158, %142 : vector<1x128xf32>
    %160 = arith.mulf %132, %147 : vector<1x128xf32>
    %161 = arith.divf %160, %132 : vector<1x128xf32>
    %162 = arith.mulf %161, %132 : vector<1x128xf32>
    %cst_5 = arith.constant 1.000000e+00 : f32
    %163 = vector.broadcast %cst_5 : f32 to vector<1x128xf32>
    %164 = arith.subf %163, %162 : vector<1x128xf32>
    %165 = arith.mulf %164, %147 : vector<1x128xf32>
    %166 = vector.broadcast %40 : f32 to vector<1x128xf32>
    %167 = arith.mulf %18, %166 : vector<1x128xf32>
    %168 = vector.broadcast %49 : f32 to vector<1x128xf32>
    %169 = arith.mulf %19, %168 : vector<1x128xf32>
    %170 = arith.addf %167, %169 : vector<1x128xf32>
    %cst_6 = arith.constant 1.000000e+00 : f32
    %171 = vector.broadcast %cst_6 : f32 to vector<1x128xf32>
    %172 = arith.addf %170, %171 : vector<1x128xf32>
    %173 = vector.broadcast %41 : f32 to vector<1x128xf32>
    %174 = arith.mulf %18, %173 : vector<1x128xf32>
    %175 = vector.broadcast %50 : f32 to vector<1x128xf32>
    %176 = arith.mulf %19, %175 : vector<1x128xf32>
    %177 = arith.addf %174, %176 : vector<1x128xf32>
    %178 = vector.broadcast %42 : f32 to vector<1x128xf32>
    %179 = arith.mulf %18, %178 : vector<1x128xf32>
    %180 = vector.broadcast %51 : f32 to vector<1x128xf32>
    %181 = arith.mulf %19, %180 : vector<1x128xf32>
    %182 = arith.addf %179, %181 : vector<1x128xf32>
    %183 = vector.broadcast %43 : f32 to vector<1x128xf32>
    %184 = arith.mulf %18, %183 : vector<1x128xf32>
    %185 = vector.broadcast %52 : f32 to vector<1x128xf32>
    %186 = arith.mulf %19, %185 : vector<1x128xf32>
    %187 = arith.addf %184, %186 : vector<1x128xf32>
    %188 = vector.broadcast %44 : f32 to vector<1x128xf32>
    %189 = arith.mulf %18, %188 : vector<1x128xf32>
    %190 = vector.broadcast %53 : f32 to vector<1x128xf32>
    %191 = arith.mulf %19, %190 : vector<1x128xf32>
    %192 = arith.addf %189, %191 : vector<1x128xf32>
    %cst_7 = arith.constant 1.000000e+00 : f32
    %193 = vector.broadcast %cst_7 : f32 to vector<1x128xf32>
    %194 = arith.addf %192, %193 : vector<1x128xf32>
    %195 = vector.broadcast %45 : f32 to vector<1x128xf32>
    %196 = arith.mulf %18, %195 : vector<1x128xf32>
    %197 = vector.broadcast %54 : f32 to vector<1x128xf32>
    %198 = arith.mulf %19, %197 : vector<1x128xf32>
    %199 = arith.addf %196, %198 : vector<1x128xf32>
    %200 = vector.broadcast %46 : f32 to vector<1x128xf32>
    %201 = arith.mulf %18, %200 : vector<1x128xf32>
    %202 = vector.broadcast %55 : f32 to vector<1x128xf32>
    %203 = arith.mulf %19, %202 : vector<1x128xf32>
    %204 = arith.addf %201, %203 : vector<1x128xf32>
    %205 = vector.broadcast %47 : f32 to vector<1x128xf32>
    %206 = arith.mulf %18, %205 : vector<1x128xf32>
    %207 = vector.broadcast %56 : f32 to vector<1x128xf32>
    %208 = arith.mulf %19, %207 : vector<1x128xf32>
    %209 = arith.addf %206, %208 : vector<1x128xf32>
    %210 = vector.broadcast %48 : f32 to vector<1x128xf32>
    %211 = arith.mulf %18, %210 : vector<1x128xf32>
    %212 = vector.broadcast %57 : f32 to vector<1x128xf32>
    %213 = arith.mulf %19, %212 : vector<1x128xf32>
    %214 = arith.addf %211, %213 : vector<1x128xf32>
    %cst_8 = arith.constant 1.000000e+00 : f32
    %215 = vector.broadcast %cst_8 : f32 to vector<1x128xf32>
    %216 = arith.addf %214, %215 : vector<1x128xf32>
    %217 = vector.broadcast %31 : f32 to vector<1x128xf32>
    %218 = arith.mulf %20, %217 : vector<1x128xf32>
    %219 = vector.broadcast %34 : f32 to vector<1x128xf32>
    %220 = arith.mulf %21, %219 : vector<1x128xf32>
    %221 = arith.addf %218, %220 : vector<1x128xf32>
    %222 = vector.broadcast %37 : f32 to vector<1x128xf32>
    %223 = arith.mulf %22, %222 : vector<1x128xf32>
    %224 = arith.addf %221, %223 : vector<1x128xf32>
    %225 = vector.broadcast %32 : f32 to vector<1x128xf32>
    %226 = arith.mulf %20, %225 : vector<1x128xf32>
    %227 = vector.broadcast %35 : f32 to vector<1x128xf32>
    %228 = arith.mulf %21, %227 : vector<1x128xf32>
    %229 = arith.addf %226, %228 : vector<1x128xf32>
    %230 = vector.broadcast %38 : f32 to vector<1x128xf32>
    %231 = arith.mulf %22, %230 : vector<1x128xf32>
    %232 = arith.addf %229, %231 : vector<1x128xf32>
    %233 = vector.broadcast %33 : f32 to vector<1x128xf32>
    %234 = arith.mulf %20, %233 : vector<1x128xf32>
    %235 = vector.broadcast %36 : f32 to vector<1x128xf32>
    %236 = arith.mulf %21, %235 : vector<1x128xf32>
    %237 = arith.addf %234, %236 : vector<1x128xf32>
    %238 = vector.broadcast %39 : f32 to vector<1x128xf32>
    %239 = arith.mulf %22, %238 : vector<1x128xf32>
    %240 = arith.addf %237, %239 : vector<1x128xf32>
    %241 = arith.mulf %2, %172 : vector<1x128xf32>
    %242 = arith.mulf %3, %187 : vector<1x128xf32>
    %243 = arith.addf %241, %242 : vector<1x128xf32>
    %244 = arith.mulf %4, %204 : vector<1x128xf32>
    %245 = arith.addf %243, %244 : vector<1x128xf32>
    %246 = arith.mulf %2, %177 : vector<1x128xf32>
    %247 = arith.mulf %3, %194 : vector<1x128xf32>
    %248 = arith.addf %246, %247 : vector<1x128xf32>
    %249 = arith.mulf %4, %209 : vector<1x128xf32>
    %250 = arith.addf %248, %249 : vector<1x128xf32>
    %251 = arith.mulf %2, %182 : vector<1x128xf32>
    %252 = arith.mulf %3, %199 : vector<1x128xf32>
    %253 = arith.addf %251, %252 : vector<1x128xf32>
    %254 = arith.mulf %4, %216 : vector<1x128xf32>
    %255 = arith.addf %253, %254 : vector<1x128xf32>
    %256 = arith.mulf %2, %224 : vector<1x128xf32>
    %257 = arith.mulf %3, %232 : vector<1x128xf32>
    %258 = arith.addf %256, %257 : vector<1x128xf32>
    %259 = arith.mulf %4, %240 : vector<1x128xf32>
    %260 = arith.addf %258, %259 : vector<1x128xf32>
    %261 = arith.addf %260, %5 : vector<1x128xf32>
    %262 = arith.mulf %6, %172 : vector<1x128xf32>
    %263 = arith.mulf %7, %187 : vector<1x128xf32>
    %264 = arith.addf %262, %263 : vector<1x128xf32>
    %265 = arith.mulf %8, %204 : vector<1x128xf32>
    %266 = arith.addf %264, %265 : vector<1x128xf32>
    %267 = arith.mulf %6, %177 : vector<1x128xf32>
    %268 = arith.mulf %7, %194 : vector<1x128xf32>
    %269 = arith.addf %267, %268 : vector<1x128xf32>
    %270 = arith.mulf %8, %209 : vector<1x128xf32>
    %271 = arith.addf %269, %270 : vector<1x128xf32>
    %272 = arith.mulf %6, %182 : vector<1x128xf32>
    %273 = arith.mulf %7, %199 : vector<1x128xf32>
    %274 = arith.addf %272, %273 : vector<1x128xf32>
    %275 = arith.mulf %8, %216 : vector<1x128xf32>
    %276 = arith.addf %274, %275 : vector<1x128xf32>
    %277 = arith.mulf %6, %224 : vector<1x128xf32>
    %278 = arith.mulf %7, %232 : vector<1x128xf32>
    %279 = arith.addf %277, %278 : vector<1x128xf32>
    %280 = arith.mulf %8, %240 : vector<1x128xf32>
    %281 = arith.addf %279, %280 : vector<1x128xf32>
    %282 = arith.addf %281, %9 : vector<1x128xf32>
    %283 = arith.mulf %10, %172 : vector<1x128xf32>
    %284 = arith.mulf %11, %187 : vector<1x128xf32>
    %285 = arith.addf %283, %284 : vector<1x128xf32>
    %286 = arith.mulf %12, %204 : vector<1x128xf32>
    %287 = arith.addf %285, %286 : vector<1x128xf32>
    %288 = arith.mulf %10, %177 : vector<1x128xf32>
    %289 = arith.mulf %11, %194 : vector<1x128xf32>
    %290 = arith.addf %288, %289 : vector<1x128xf32>
    %291 = arith.mulf %12, %209 : vector<1x128xf32>
    %292 = arith.addf %290, %291 : vector<1x128xf32>
    %293 = arith.mulf %10, %182 : vector<1x128xf32>
    %294 = arith.mulf %11, %199 : vector<1x128xf32>
    %295 = arith.addf %293, %294 : vector<1x128xf32>
    %296 = arith.mulf %12, %216 : vector<1x128xf32>
    %297 = arith.addf %295, %296 : vector<1x128xf32>
    %298 = arith.mulf %10, %224 : vector<1x128xf32>
    %299 = arith.mulf %11, %232 : vector<1x128xf32>
    %300 = arith.addf %298, %299 : vector<1x128xf32>
    %301 = arith.mulf %12, %240 : vector<1x128xf32>
    %302 = arith.addf %300, %301 : vector<1x128xf32>
    %303 = arith.addf %302, %13 : vector<1x128xf32>
    %304 = arith.mulf %14, %172 : vector<1x128xf32>
    %305 = arith.mulf %15, %187 : vector<1x128xf32>
    %306 = arith.addf %304, %305 : vector<1x128xf32>
    %307 = arith.mulf %16, %204 : vector<1x128xf32>
    %308 = arith.addf %306, %307 : vector<1x128xf32>
    %309 = arith.mulf %14, %177 : vector<1x128xf32>
    %310 = arith.mulf %15, %194 : vector<1x128xf32>
    %311 = arith.addf %309, %310 : vector<1x128xf32>
    %312 = arith.mulf %16, %209 : vector<1x128xf32>
    %313 = arith.addf %311, %312 : vector<1x128xf32>
    %314 = arith.mulf %14, %182 : vector<1x128xf32>
    %315 = arith.mulf %15, %199 : vector<1x128xf32>
    %316 = arith.addf %314, %315 : vector<1x128xf32>
    %317 = arith.mulf %16, %216 : vector<1x128xf32>
    %318 = arith.addf %316, %317 : vector<1x128xf32>
    %319 = arith.mulf %14, %224 : vector<1x128xf32>
    %320 = arith.mulf %15, %232 : vector<1x128xf32>
    %321 = arith.addf %319, %320 : vector<1x128xf32>
    %322 = arith.mulf %16, %240 : vector<1x128xf32>
    %323 = arith.addf %321, %322 : vector<1x128xf32>
    %324 = arith.addf %323, %17 : vector<1x128xf32>
    %325 = vector.broadcast %59 : f32 to vector<1x128xf32>
    %326 = arith.mulf %325, %303 : vector<1x128xf32>
    %327 = vector.broadcast %60 : f32 to vector<1x128xf32>
    %328 = arith.mulf %327, %282 : vector<1x128xf32>
    %329 = arith.subf %326, %328 : vector<1x128xf32>
    %330 = vector.broadcast %60 : f32 to vector<1x128xf32>
    %331 = arith.mulf %330, %261 : vector<1x128xf32>
    %332 = vector.broadcast %58 : f32 to vector<1x128xf32>
    %333 = arith.mulf %332, %303 : vector<1x128xf32>
    %334 = arith.subf %331, %333 : vector<1x128xf32>
    %335 = vector.broadcast %58 : f32 to vector<1x128xf32>
    %336 = arith.mulf %335, %282 : vector<1x128xf32>
    %337 = vector.broadcast %59 : f32 to vector<1x128xf32>
    %338 = arith.mulf %337, %261 : vector<1x128xf32>
    %339 = arith.subf %336, %338 : vector<1x128xf32>
    %340 = vector.broadcast %61 : f32 to vector<1x128xf32>
    %341 = arith.addf %340, %329 : vector<1x128xf32>
    %342 = vector.broadcast %62 : f32 to vector<1x128xf32>
    %343 = arith.addf %342, %334 : vector<1x128xf32>
    %344 = vector.broadcast %63 : f32 to vector<1x128xf32>
    %345 = arith.addf %344, %339 : vector<1x128xf32>
    %346 = arith.mulf %245, %341 : vector<1x128xf32>
    %347 = arith.mulf %266, %343 : vector<1x128xf32>
    %348 = arith.addf %346, %347 : vector<1x128xf32>
    %349 = arith.mulf %287, %345 : vector<1x128xf32>
    %350 = arith.addf %348, %349 : vector<1x128xf32>
    %351 = arith.mulf %250, %341 : vector<1x128xf32>
    %352 = arith.mulf %271, %343 : vector<1x128xf32>
    %353 = arith.addf %351, %352 : vector<1x128xf32>
    %354 = arith.mulf %292, %345 : vector<1x128xf32>
    %355 = arith.addf %353, %354 : vector<1x128xf32>
    %356 = arith.mulf %255, %341 : vector<1x128xf32>
    %357 = arith.mulf %276, %343 : vector<1x128xf32>
    %358 = arith.addf %356, %357 : vector<1x128xf32>
    %359 = arith.mulf %297, %345 : vector<1x128xf32>
    %360 = arith.addf %358, %359 : vector<1x128xf32>
    %cst_9 = arith.constant 0.000000e+00 : f32
    %361 = vector.broadcast %cst_9 : f32 to vector<1x128xf32>
    %362 = vector.broadcast %70 : f32 to vector<1x128xf32>
    %363 = arith.mulf %23, %362 : vector<1x128xf32>
    %364 = vector.broadcast %79 : f32 to vector<1x128xf32>
    %365 = arith.mulf %24, %364 : vector<1x128xf32>
    %366 = arith.addf %363, %365 : vector<1x128xf32>
    %cst_10 = arith.constant 1.000000e+00 : f32
    %367 = vector.broadcast %cst_10 : f32 to vector<1x128xf32>
    %368 = arith.addf %366, %367 : vector<1x128xf32>
    %369 = vector.broadcast %71 : f32 to vector<1x128xf32>
    %370 = arith.mulf %23, %369 : vector<1x128xf32>
    %371 = vector.broadcast %80 : f32 to vector<1x128xf32>
    %372 = arith.mulf %24, %371 : vector<1x128xf32>
    %373 = arith.addf %370, %372 : vector<1x128xf32>
    %374 = vector.broadcast %72 : f32 to vector<1x128xf32>
    %375 = arith.mulf %23, %374 : vector<1x128xf32>
    %376 = vector.broadcast %81 : f32 to vector<1x128xf32>
    %377 = arith.mulf %24, %376 : vector<1x128xf32>
    %378 = arith.addf %375, %377 : vector<1x128xf32>
    %379 = vector.broadcast %73 : f32 to vector<1x128xf32>
    %380 = arith.mulf %23, %379 : vector<1x128xf32>
    %381 = vector.broadcast %82 : f32 to vector<1x128xf32>
    %382 = arith.mulf %24, %381 : vector<1x128xf32>
    %383 = arith.addf %380, %382 : vector<1x128xf32>
    %384 = vector.broadcast %74 : f32 to vector<1x128xf32>
    %385 = arith.mulf %23, %384 : vector<1x128xf32>
    %386 = vector.broadcast %83 : f32 to vector<1x128xf32>
    %387 = arith.mulf %24, %386 : vector<1x128xf32>
    %388 = arith.addf %385, %387 : vector<1x128xf32>
    %cst_11 = arith.constant 1.000000e+00 : f32
    %389 = vector.broadcast %cst_11 : f32 to vector<1x128xf32>
    %390 = arith.addf %388, %389 : vector<1x128xf32>
    %391 = vector.broadcast %75 : f32 to vector<1x128xf32>
    %392 = arith.mulf %23, %391 : vector<1x128xf32>
    %393 = vector.broadcast %84 : f32 to vector<1x128xf32>
    %394 = arith.mulf %24, %393 : vector<1x128xf32>
    %395 = arith.addf %392, %394 : vector<1x128xf32>
    %396 = vector.broadcast %76 : f32 to vector<1x128xf32>
    %397 = arith.mulf %23, %396 : vector<1x128xf32>
    %398 = vector.broadcast %85 : f32 to vector<1x128xf32>
    %399 = arith.mulf %24, %398 : vector<1x128xf32>
    %400 = arith.addf %397, %399 : vector<1x128xf32>
    %401 = vector.broadcast %77 : f32 to vector<1x128xf32>
    %402 = arith.mulf %23, %401 : vector<1x128xf32>
    %403 = vector.broadcast %86 : f32 to vector<1x128xf32>
    %404 = arith.mulf %24, %403 : vector<1x128xf32>
    %405 = arith.addf %402, %404 : vector<1x128xf32>
    %406 = vector.broadcast %78 : f32 to vector<1x128xf32>
    %407 = arith.mulf %23, %406 : vector<1x128xf32>
    %408 = vector.broadcast %87 : f32 to vector<1x128xf32>
    %409 = arith.mulf %24, %408 : vector<1x128xf32>
    %410 = arith.addf %407, %409 : vector<1x128xf32>
    %cst_12 = arith.constant 1.000000e+00 : f32
    %411 = vector.broadcast %cst_12 : f32 to vector<1x128xf32>
    %412 = arith.addf %410, %411 : vector<1x128xf32>
    %413 = vector.broadcast %61 : f32 to vector<1x128xf32>
    %414 = arith.mulf %25, %413 : vector<1x128xf32>
    %415 = vector.broadcast %64 : f32 to vector<1x128xf32>
    %416 = arith.mulf %26, %415 : vector<1x128xf32>
    %417 = arith.addf %414, %416 : vector<1x128xf32>
    %418 = vector.broadcast %67 : f32 to vector<1x128xf32>
    %419 = arith.mulf %27, %418 : vector<1x128xf32>
    %420 = arith.addf %417, %419 : vector<1x128xf32>
    %421 = vector.broadcast %62 : f32 to vector<1x128xf32>
    %422 = arith.mulf %25, %421 : vector<1x128xf32>
    %423 = vector.broadcast %65 : f32 to vector<1x128xf32>
    %424 = arith.mulf %26, %423 : vector<1x128xf32>
    %425 = arith.addf %422, %424 : vector<1x128xf32>
    %426 = vector.broadcast %68 : f32 to vector<1x128xf32>
    %427 = arith.mulf %27, %426 : vector<1x128xf32>
    %428 = arith.addf %425, %427 : vector<1x128xf32>
    %429 = vector.broadcast %63 : f32 to vector<1x128xf32>
    %430 = arith.mulf %25, %429 : vector<1x128xf32>
    %431 = vector.broadcast %66 : f32 to vector<1x128xf32>
    %432 = arith.mulf %26, %431 : vector<1x128xf32>
    %433 = arith.addf %430, %432 : vector<1x128xf32>
    %434 = vector.broadcast %69 : f32 to vector<1x128xf32>
    %435 = arith.mulf %27, %434 : vector<1x128xf32>
    %436 = arith.addf %433, %435 : vector<1x128xf32>
    %437 = arith.mulf %245, %368 : vector<1x128xf32>
    %438 = arith.mulf %250, %383 : vector<1x128xf32>
    %439 = arith.addf %437, %438 : vector<1x128xf32>
    %440 = arith.mulf %255, %400 : vector<1x128xf32>
    %441 = arith.addf %439, %440 : vector<1x128xf32>
    %442 = arith.mulf %245, %373 : vector<1x128xf32>
    %443 = arith.mulf %250, %390 : vector<1x128xf32>
    %444 = arith.addf %442, %443 : vector<1x128xf32>
    %445 = arith.mulf %255, %405 : vector<1x128xf32>
    %446 = arith.addf %444, %445 : vector<1x128xf32>
    %447 = arith.mulf %245, %378 : vector<1x128xf32>
    %448 = arith.mulf %250, %395 : vector<1x128xf32>
    %449 = arith.addf %447, %448 : vector<1x128xf32>
    %450 = arith.mulf %255, %412 : vector<1x128xf32>
    %451 = arith.addf %449, %450 : vector<1x128xf32>
    %452 = arith.mulf %245, %420 : vector<1x128xf32>
    %453 = arith.mulf %250, %428 : vector<1x128xf32>
    %454 = arith.addf %452, %453 : vector<1x128xf32>
    %455 = arith.mulf %255, %436 : vector<1x128xf32>
    %456 = arith.addf %454, %455 : vector<1x128xf32>
    %457 = arith.addf %456, %261 : vector<1x128xf32>
    %458 = arith.mulf %266, %368 : vector<1x128xf32>
    %459 = arith.mulf %271, %383 : vector<1x128xf32>
    %460 = arith.addf %458, %459 : vector<1x128xf32>
    %461 = arith.mulf %276, %400 : vector<1x128xf32>
    %462 = arith.addf %460, %461 : vector<1x128xf32>
    %463 = arith.mulf %266, %373 : vector<1x128xf32>
    %464 = arith.mulf %271, %390 : vector<1x128xf32>
    %465 = arith.addf %463, %464 : vector<1x128xf32>
    %466 = arith.mulf %276, %405 : vector<1x128xf32>
    %467 = arith.addf %465, %466 : vector<1x128xf32>
    %468 = arith.mulf %266, %378 : vector<1x128xf32>
    %469 = arith.mulf %271, %395 : vector<1x128xf32>
    %470 = arith.addf %468, %469 : vector<1x128xf32>
    %471 = arith.mulf %276, %412 : vector<1x128xf32>
    %472 = arith.addf %470, %471 : vector<1x128xf32>
    %473 = arith.mulf %266, %420 : vector<1x128xf32>
    %474 = arith.mulf %271, %428 : vector<1x128xf32>
    %475 = arith.addf %473, %474 : vector<1x128xf32>
    %476 = arith.mulf %276, %436 : vector<1x128xf32>
    %477 = arith.addf %475, %476 : vector<1x128xf32>
    %478 = arith.addf %477, %282 : vector<1x128xf32>
    %479 = arith.mulf %287, %368 : vector<1x128xf32>
    %480 = arith.mulf %292, %383 : vector<1x128xf32>
    %481 = arith.addf %479, %480 : vector<1x128xf32>
    %482 = arith.mulf %297, %400 : vector<1x128xf32>
    %483 = arith.addf %481, %482 : vector<1x128xf32>
    %484 = arith.mulf %287, %373 : vector<1x128xf32>
    %485 = arith.mulf %292, %390 : vector<1x128xf32>
    %486 = arith.addf %484, %485 : vector<1x128xf32>
    %487 = arith.mulf %297, %405 : vector<1x128xf32>
    %488 = arith.addf %486, %487 : vector<1x128xf32>
    %489 = arith.mulf %287, %378 : vector<1x128xf32>
    %490 = arith.mulf %292, %395 : vector<1x128xf32>
    %491 = arith.addf %489, %490 : vector<1x128xf32>
    %492 = arith.mulf %297, %412 : vector<1x128xf32>
    %493 = arith.addf %491, %492 : vector<1x128xf32>
    %494 = arith.mulf %287, %420 : vector<1x128xf32>
    %495 = arith.mulf %292, %428 : vector<1x128xf32>
    %496 = arith.addf %494, %495 : vector<1x128xf32>
    %497 = arith.mulf %297, %436 : vector<1x128xf32>
    %498 = arith.addf %496, %497 : vector<1x128xf32>
    %499 = arith.addf %498, %303 : vector<1x128xf32>
    %500 = arith.mulf %308, %368 : vector<1x128xf32>
    %501 = arith.mulf %313, %383 : vector<1x128xf32>
    %502 = arith.addf %500, %501 : vector<1x128xf32>
    %503 = arith.mulf %318, %400 : vector<1x128xf32>
    %504 = arith.addf %502, %503 : vector<1x128xf32>
    %505 = arith.mulf %308, %373 : vector<1x128xf32>
    %506 = arith.mulf %313, %390 : vector<1x128xf32>
    %507 = arith.addf %505, %506 : vector<1x128xf32>
    %508 = arith.mulf %318, %405 : vector<1x128xf32>
    %509 = arith.addf %507, %508 : vector<1x128xf32>
    %510 = arith.mulf %308, %378 : vector<1x128xf32>
    %511 = arith.mulf %313, %395 : vector<1x128xf32>
    %512 = arith.addf %510, %511 : vector<1x128xf32>
    %513 = arith.mulf %318, %412 : vector<1x128xf32>
    %514 = arith.addf %512, %513 : vector<1x128xf32>
    %515 = arith.mulf %308, %420 : vector<1x128xf32>
    %516 = arith.mulf %313, %428 : vector<1x128xf32>
    %517 = arith.addf %515, %516 : vector<1x128xf32>
    %518 = arith.mulf %318, %436 : vector<1x128xf32>
    %519 = arith.addf %517, %518 : vector<1x128xf32>
    %520 = arith.addf %519, %324 : vector<1x128xf32>
    %521 = tpu.concatenate %116, %124, %132, %153, %159, %165, %361, %361, %361, %350, %355, %360, %441, %446, %451, %457 in 0 : vector<1x128xf32>, vector<1x128xf32>, vector<1x128xf32>, vector<1x128xf32>, vector<1x128xf32>, vector<1x128xf32>, vector<1x128xf32>, vector<1x128xf32>, vector<1x128xf32>, vector<1x128xf32>, vector<1x128xf32>, vector<1x128xf32>, vector<1x128xf32>, vector<1x128xf32>, vector<1x128xf32>, vector<1x128xf32> -> vector<16x128xf32>
    %522 = tpu.concatenate %462, %467, %472, %478, %483, %488, %493, %499, %504, %509, %514, %520 in 0 : vector<1x128xf32>, vector<1x128xf32>, vector<1x128xf32>, vector<1x128xf32>, vector<1x128xf32>, vector<1x128xf32>, vector<1x128xf32>, vector<1x128xf32>, vector<1x128xf32>, vector<1x128xf32>, vector<1x128xf32>, vector<1x128xf32> -> vector<12x128xf32>
    %523 = tpu.concatenate %521, %522 in 0 : vector<16x128xf32>, vector<12x128xf32> -> vector<28x128xf32>
    %c0_13 = arith.constant 0 : index
    %c0_14 = arith.constant 0 : index
    %524 = vector.load %arg4[%c0_13, %c0_14] : memref<28x128xf32, #tpu.memory_space<vmem>>, vector<28x128xf32>
    tpu.vector_store %arg4[%c0_13, %c0_14], %523 {strides = array<i32>} : memref<28x128xf32, #tpu.memory_space<vmem>>, vector<28x128xf32>,
    return
  }
  func.func @transform_0(%arg0: i32) -> i32 {
    %c0_i32 = arith.constant 0 : i32
    %c0_i32_0 = arith.constant 0 : i32
    return %c0_i32 : i32
  }
  func.func @transform_1(%arg0: i32) -> (i32, i32) {
    %c0_i32 = arith.constant 0 : i32
    %c0_i32_0 = arith.constant 0 : i32
    return %c0_i32, %arg0 : i32, i32
  }
  func.func @transform_2(%arg0: i32) -> (i32, i32) {
    %c0_i32 = arith.constant 0 : i32
    %c0_i32_0 = arith.constant 0 : i32
    return %c0_i32, %arg0 : i32, i32
  }
  func.func @transform_3(%arg0: i32) -> (i32, i32) {
    %c0_i32 = arith.constant 0 : i32
    %c0_i32_0 = arith.constant 0 : i32
    return %c0_i32, %arg0 : i32, i32
  }
}

</mosaic_0001>

<llo_original>
// kernel: twist_forward.1
$region0: #{twist_forward.1}
  #allocation0 [shape = 'u32[]', space=smem, size = 0x4, offset = 0x4, fixed_abs, tag = 'smem constant byte address 0x4 - core index']
  #allocation1 [shape = 'u32[144,128]{1,0:T(1,128)}', space=vmem, size = 0x12000, scoped, tag = 'internal scratch']
  %s0 = inlined_call_operand.vmem [shape: f32[60], index: 0, kind: input, shape index: {}]
  %s1 = inlined_call_operand.vmem [shape: f32[16,128], index: 1, kind: input, shape index: {}]
  %s2 = inlined_call_operand.vmem [shape: f32[10,128], index: 2, kind: input, shape index: {}]
  %s3 = inlined_call_operand.vmem [shape: f32[28,128], index: 3, kind: output, shape index: {}]
  %s4 = sld [smem:[#allocation0]]
  $region26: #{twist_forward.1} parent=0
    _
  %s6 = ssub.s32 1, %s4
  %s7 = scalar_select 0, %s6, %s4
  $region1: #{twist_forward.1} parent=0
    #allocation2 [shape = 'u8[512]{0}', space=smem, size = 0x200, scoped, tag = 'input window, operand 0, single buffered']
    #allocation3 [shape = 's32[1]{0}', space=sflag, size = 0x4, scoped, tag = 'scoped memory for twist_forward.1']
    %8 = vsyncpa [#allocation3], 0
    // Predicated region
    $region2: #{twist_forward.1} parent=1 // pred_check
      _
    $region3: #{twist_forward.1} parent=1 // pred_check_branch
      %10 = sbr.rel (0) target = $region5
    $region4: #{twist_forward.1} parent=1 // pred_region
      %s12 = ssub.s32 16, 16
      %13 = vsyncadd [#allocation3], %s12
      %s15 = sshll.u32 %s0, 4
      %s16 = int_to_ptr.vmem [resolvable:$true] %s15
      %18 = dma.vmem_to_smem %s16, 16, [#allocation2], [#allocation3]
    $region5: #{twist_forward.1} parent=1 // pred_fallthru
      _
    // Predicated region
    $region6: #{twist_forward.1} parent=1 // pred_check
      _
    $region7: #{twist_forward.1} parent=1 // pred_check_branch
      %20 = sbr.rel (0) target = $region9
    $region8: #{twist_forward.1} parent=1 // pred_region
      _
    $region9: #{twist_forward.1} parent=1 // pred_fallthru
      _
    // Predicated region
    $region10: #{twist_forward.1} parent=1 // pred_check
      _
    $region11: #{twist_forward.1} parent=1 // pred_check_branch
      %22 = sbr.rel (0) target = $region13
    $region12: #{twist_forward.1} parent=1 // pred_region
      _
    $region13: #{twist_forward.1} parent=1 // pred_fallthru
      _
    // Predicated region
    $region14: #{twist_forward.1} parent=1 // pred_check
      _
    $region15: #{twist_forward.1} parent=1 // pred_check_branch
      %24 = sbr.rel (0) target = $region17
    $region16: #{twist_forward.1} parent=1 // pred_region
      %25 = dma.done [#allocation3], 16
    $region17: #{twist_forward.1} parent=1 // pred_fallthru
      _
    %26 = sfence
    %v27 = vld [vmem:[%s1] sm:$0xff]
    %v28 = vld [vmem:[%s1 + $0x8] sm:$0xff]
    %v29 = vld [vmem:[%s2] sm:$0xff]
    %v30 = vld [vmem:[%s2 + $0x8] sm:$0x3]
    %s31 = sld [smem:[#allocation2]]
    %s32 = sld [smem:[#allocation2 + $0x1]]
    %s33 = sld [smem:[#allocation2 + $0x2]]
    %s34 = sld [smem:[#allocation2 + $0x3]]
    %s35 = sld [smem:[#allocation2 + $0x4]]
    %s36 = sld [smem:[#allocation2 + $0x5]]
    %s37 = sld [smem:[#allocation2 + $0x6]]
    %s38 = sld [smem:[#allocation2 + $0x7]]
    %s39 = sld [smem:[#allocation2 + $0x8]]
    %s40 = sld [smem:[#allocation2 + $0x9]]
    %s41 = sld [smem:[#allocation2 + $0xa]]
    %s42 = sld [smem:[#allocation2 + $0xb]]
    %s43 = sld [smem:[#allocation2 + $0xc]]
    %s44 = sld [smem:[#allocation2 + $0xd]]
    %s45 = sld [smem:[#allocation2 + $0xe]]
    %s46 = sld [smem:[#allocation2 + $0xf]]
    %s47 = sld [smem:[#allocation2 + $0x10]]
    %s48 = sld [smem:[#allocation2 + $0x11]]
    %s49 = sld [smem:[#allocation2 + $0x12]]
    %s50 = sld [smem:[#allocation2 + $0x13]]
    %s51 = sld [smem:[#allocation2 + $0x14]]
    %s52 = sld [smem:[#allocation2 + $0x15]]
    %s53 = sld [smem:[#allocation2 + $0x16]]
    %s54 = sld [smem:[#allocation2 + $0x17]]
    %s55 = sld [smem:[#allocation2 + $0x18]]
    %s56 = sld [smem:[#allocation2 + $0x19]]
    %s57 = sld [smem:[#allocation2 + $0x1a]]
    %s58 = sld [smem:[#allocation2 + $0x1b]]
    %s59 = sld [smem:[#allocation2 + $0x1c]]
    %s60 = sld [smem:[#allocation2 + $0x1d]]
    %s61 = sld [smem:[#allocation2 + $0x1e]]
    %s62 = sld [smem:[#allocation2 + $0x1f]]
    %s63 = sld [smem:[#allocation2 + $0x20]]
    %s64 = sld [smem:[#allocation2 + $0x21]]
    %s65 = sld [smem:[#allocation2 + $0x22]]
    %s66 = sld [smem:[#allocation2 + $0x23]]
    %s67 = sld [smem:[#allocation2 + $0x24]]
    %s68 = sld [smem:[#allocation2 + $0x25]]
    %s69 = sld [smem:[#allocation2 + $0x26]]
    %s70 = sld [smem:[#allocation2 + $0x27]]
    %s71 = sld [smem:[#allocation2 + $0x28]]
    %s72 = sld [smem:[#allocation2 + $0x29]]
    %s73 = sld [smem:[#allocation2 + $0x2a]]
    %s74 = sld [smem:[#allocation2 + $0x2b]]
    %s75 = sld [smem:[#allocation2 + $0x2c]]
    %s76 = sld [smem:[#allocation2 + $0x2d]]
    %s77 = sld [smem:[#allocation2 + $0x2e]]
    %s78 = sld [smem:[#allocation2 + $0x2f]]
    %s79 = sld [smem:[#allocation2 + $0x30]]
    %s80 = sld [smem:[#allocation2 + $0x31]]
    %s81 = sld [smem:[#allocation2 + $0x32]]
    %s82 = sld [smem:[#allocation2 + $0x33]]
    %s83 = sld [smem:[#allocation2 + $0x34]]
    %s84 = sld [smem:[#allocation2 + $0x35]]
    %s85 = sld [smem:[#allocation2 + $0x36]]
    %s86 = sld [smem:[#allocation2 + $0x37]]
    %s87 = sld [smem:[#allocation2 + $0x38]]
    %s88 = sld [smem:[#allocation2 + $0x39]]
    %s89 = sld [smem:[#allocation2 + $0x3a]]
    %s90 = sld [smem:[#allocation2 + $0x3b]]
    %v91 = vstv %s32
    %v92 = vmul.f32 %v91, %v28
    %v93 = vstv %s33
    %v94 = vmul.f32 %v93, %v27
    %v96 = vrot.slane %v94, 4
    %v98 = vsub.f32 %v92, %v96
    %v99 = vstv %s31
    %v100 = vmul.f32 %v99, %v28
    %v101 = vsub.f32 %v94, %v100
    %v102 = vmul.f32 %v99, %v27
    %v103 = vmul.f32 %v91, %v27
    %v105 = vrot.slane %v103, 4
    %v107 = vsub.f32 %v102, %v105
    %v108 = vstv %s34
    %v109 = vadd.f32 %v108, %v98
    %v110 = vstv %s35
    %v111 = vadd.f32 %v110, %v101
    %v112 = vstv %s36
    %v113 = vadd.f32 %v112, %v107
    %v114 = vadd.f32 %v102, %v105
    %v115 = vmul.f32 %v28, %v93
    %v116 = vadd.f32 %v114, %v115
    %v118 = vrot.slane %v109, 3
    %v120 = vmul.f32 %v27, %v118
    %v122 = vrot.slane %v111, 7
    %v124 = vmul.f32 %v27, %v122
    %v126 = vrot.slane %v124, 4
    %v128 = vadd.f32 %v120, %v126
    %v130 = vrot.slane %v113, 7
    %v132 = vmul.f32 %v28, %v130
    %v133 = vadd.f32 %v128, %v132
    %v134 = vrot.slane %v109, 2
    %v136 = vmul.f32 %v27, %v134
    %v137 = vrot.slane %v111, 6
    %v139 = vmul.f32 %v27, %v137
    %v141 = vrot.slane %v139, 4
    %v143 = vadd.f32 %v136, %v141
    %v144 = vrot.slane %v113, 6
    %v146 = vmul.f32 %v28, %v144
    %v147 = vadd.f32 %v143, %v146
    %v148 = vrot.slane %v109, 1
    %v150 = vmul.f32 %v27, %v148
    %v151 = vrot.slane %v111, 5
    %v153 = vmul.f32 %v27, %v151
    %v155 = vrot.slane %v153, 4
    %v157 = vadd.f32 %v150, %v155
    %v158 = vrot.slane %v113, 5
    %v160 = vmul.f32 %v28, %v158
    %v161 = vadd.f32 %v157, %v160
    %v162 = vmul.f32 %v116, %v133
    %v163 = vrcp.pop %v116
    %v164 = vmul.f32 %v162, %v163
    %v165 = vmul.f32 %v164, %v116
    %v166 = vsub.f32 1.0, %v165
    %v167 = vmul.f32 %v166, %v133
    %v168 = vmul.f32 %v116, %v147
    %v169 = vmul.f32 %v168, %v163
    %v170 = vmul.f32 %v169, %v116
    %v171 = vsub.f32 1.0, %v170
    %v172 = vmul.f32 %v171, %v147
    %v173 = vmul.f32 %v116, %v161
    %v174 = vmul.f32 %v173, %v163
    %v175 = vmul.f32 %v174, %v116
    %v176 = vsub.f32 1.0, %v175
    %v177 = vmul.f32 %v176, %v161
    %v178 = vstv %s43
    %v179 = vmul.f32 %v29, %v178
    %v180 = vstv %s52
    %v181 = vmul.f32 %v29, %v180
    %v183 = vrot.slane %v181, 1
    %v185 = vadd.f32 %v179, %v183
    %v186 = vadd.f32 %v185, 1.0
    %v187 = vstv %s44
    %v188 = vmul.f32 %v29, %v187
    %v189 = vstv %s53
    %v190 = vmul.f32 %v29, %v189
    %v192 = vrot.slane %v190, 1
    %v194 = vadd.f32 %v188, %v192
    %v195 = vstv %s45
    %v196 = vmul.f32 %v29, %v195
    %v197 = vstv %s54
    %v198 = vmul.f32 %v29, %v197
    %v200 = vrot.slane %v198, 1
    %v202 = vadd.f32 %v196, %v200
    %v203 = vstv %s46
    %v204 = vmul.f32 %v29, %v203
    %v205 = vstv %s55
    %v206 = vmul.f32 %v29, %v205
    %v208 = vrot.slane %v206, 1
    %v210 = vadd.f32 %v204, %v208
    %v211 = vstv %s47
    %v212 = vmul.f32 %v29, %v211
    %v213 = vstv %s56
    %v214 = vmul.f32 %v29, %v213
    %v216 = vrot.slane %v214, 1
    %v218 = vadd.f32 %v212, %v216
    %v219 = vadd.f32 %v218, 1.0
    %v220 = vstv %s48
    %v221 = vmul.f32 %v29, %v220
    %v222 = vstv %s57
    %v223 = vmul.f32 %v29, %v222
    %v225 = vrot.slane %v223, 1
    %v227 = vadd.f32 %v221, %v225
    %v228 = vstv %s49
    %v229 = vmul.f32 %v29, %v228
    %v230 = vstv %s58
    %v231 = vmul.f32 %v29, %v230
    %v233 = vrot.slane %v231, 1
    %v235 = vadd.f32 %v229, %v233
    %v236 = vstv %s50
    %v237 = vmul.f32 %v29, %v236
    %v238 = vstv %s59
    %v239 = vmul.f32 %v29, %v238
    %v241 = vrot.slane %v239, 1
    %v243 = vadd.f32 %v237, %v241
    %v244 = vstv %s51
    %v245 = vmul.f32 %v29, %v244
    %v246 = vstv %s60
    %v247 = vmul.f32 %v29, %v246
    %v249 = vrot.slane %v247, 1
    %v251 = vadd.f32 %v245, %v249
    %v252 = vadd.f32 %v251, 1.0
    %v253 = vmul.f32 %v29, %v108
    %v254 = vstv %s37
    %v255 = vmul.f32 %v29, %v254
    %v257 = vrot.slane %v255, 1
    %v259 = vadd.f32 %v253, %v257
    %v260 = vstv %s40
    %v261 = vmul.f32 %v29, %v260
    %v263 = vrot.slane %v261, 2
    %v265 = vadd.f32 %v259, %v263
    %v266 = vmul.f32 %v29, %v110
    %v267 = vstv %s38
    %v268 = vmul.f32 %v29, %v267
    %v270 = vrot.slane %v268, 1
    %v272 = vadd.f32 %v266, %v270
    %v273 = vstv %s41
    %v274 = vmul.f32 %v29, %v273
    %v276 = vrot.slane %v274, 2
    %v278 = vadd.f32 %v272, %v276
    %v279 = vmul.f32 %v29, %v112
    %v280 = vstv %s39
    %v281 = vmul.f32 %v29, %v280
    %v283 = vrot.slane %v281, 1
    %v285 = vadd.f32 %v279, %v283
    %v286 = vstv %s42
    %v287 = vmul.f32 %v29, %v286
    %v289 = vrot.slane %v287, 2
    %v291 = vadd.f32 %v285, %v289
    %v292 = vmul.f32 %v27, %v186
    %v294 = vrot.slane %v210, 7
    %v296 = vmul.f32 %v27, %v294
    %v298 = vrot.slane %v296, 1
    %v300 = vadd.f32 %v292, %v298
    %v302 = vrot.slane %v235, 6
    %v304 = vmul.f32 %v27, %v302
    %v306 = vrot.slane %v304, 2
    %v308 = vadd.f32 %v300, %v306
    %v309 = vmul.f32 %v27, %v194
    %v311 = vrot.slane %v219, 7
    %v313 = vmul.f32 %v27, %v311
    %v315 = vrot.slane %v313, 1
    %v317 = vadd.f32 %v309, %v315
    %v319 = vrot.slane %v243, 6
    %v321 = vmul.f32 %v27, %v319
    %v323 = vrot.slane %v321, 2
    %v325 = vadd.f32 %v317, %v323
    %v326 = vmul.f32 %v27, %v202
    %v328 = vrot.slane %v227, 7
    %v330 = vmul.f32 %v27, %v328
    %v332 = vrot.slane %v330, 1
    %v334 = vadd.f32 %v326, %v332
    %v336 = vrot.slane %v252, 6
    %v338 = vmul.f32 %v27, %v336
    %v340 = vrot.slane %v338, 2
    %v342 = vadd.f32 %v334, %v340
    %v344 = vrot.slane %v265, 2
    %v346 = vmul.f32 %v27, %v344
    %v348 = vrot.slane %v278, 1
    %v350 = vmul.f32 %v27, %v348
    %v352 = vrot.slane %v350, 1
    %v354 = vadd.f32 %v346, %v352
    %v355 = vmul.f32 %v27, %v291
    %v357 = vrot.slane %v355, 2
    %v359 = vadd.f32 %v354, %v357
    %v361 = vrot.slane %v27, 3
    %v363 = vadd.f32 %v359, %v361
    %v365 = vrot.slane %v186, 4
    %v367 = vmul.f32 %v27, %v365
    %v368 = vrot.slane %v210, 3
    %v370 = vmul.f32 %v27, %v368
    %v372 = vrot.slane %v370, 1
    %v374 = vadd.f32 %v367, %v372
    %v375 = vrot.slane %v235, 2
    %v377 = vmul.f32 %v27, %v375
    %v379 = vrot.slane %v377, 2
    %v381 = vadd.f32 %v374, %v379
    %v383 = vrot.slane %v194, 4
    %v385 = vmul.f32 %v27, %v383
    %v386 = vrot.slane %v219, 3
    %v388 = vmul.f32 %v27, %v386
    %v390 = vrot.slane %v388, 1
    %v392 = vadd.f32 %v385, %v390
    %v393 = vrot.slane %v243, 2
    %v395 = vmul.f32 %v27, %v393
    %v397 = vrot.slane %v395, 2
    %v399 = vadd.f32 %v392, %v397
    %v401 = vrot.slane %v202, 4
    %v403 = vmul.f32 %v27, %v401
    %v404 = vrot.slane %v227, 3
    %v406 = vmul.f32 %v27, %v404
    %v408 = vrot.slane %v406, 1
    %v410 = vadd.f32 %v403, %v408
    %v411 = vrot.slane %v252, 2
    %v413 = vmul.f32 %v27, %v411
    %v415 = vrot.slane %v413, 2
    %v417 = vadd.f32 %v410, %v415
    %v418 = vrot.slane %v265, 6
    %v420 = vmul.f32 %v27, %v418
    %v421 = vrot.slane %v278, 5
    %v423 = vmul.f32 %v27, %v421
    %v425 = vrot.slane %v423, 1
    %v427 = vadd.f32 %v420, %v425
    %v429 = vrot.slane %v291, 4
    %v431 = vmul.f32 %v27, %v429
    %v433 = vrot.slane %v431, 2
    %v435 = vadd.f32 %v427, %v433
    %v436 = vadd.f32 %v435, %v361
    %v437 = vmul.f32 %v28, %v186
    %v438 = vmul.f32 %v28, %v294
    %v440 = vrot.slane %v438, 1
    %v442 = vadd.f32 %v437, %v440
    %v443 = vmul.f32 %v28, %v302
    %v445 = vrot.slane %v443, 2
    %v447 = vadd.f32 %v442, %v445
    %v448 = vmul.f32 %v28, %v194
    %v449 = vmul.f32 %v28, %v311
    %v451 = vrot.slane %v449, 1
    %v453 = vadd.f32 %v448, %v451
    %v454 = vmul.f32 %v28, %v319
    %v456 = vrot.slane %v454, 2
    %v458 = vadd.f32 %v453, %v456
    %v459 = vmul.f32 %v28, %v202
    %v460 = vmul.f32 %v28, %v328
    %v462 = vrot.slane %v460, 1
    %v464 = vadd.f32 %v459, %v462
    %v465 = vmul.f32 %v28, %v336
    %v467 = vrot.slane %v465, 2
    %v469 = vadd.f32 %v464, %v467
    %v470 = vmul.f32 %v28, %v344
    %v471 = vmul.f32 %v28, %v348
    %v473 = vrot.slane %v471, 1
    %v475 = vadd.f32 %v470, %v473
    %v476 = vmul.f32 %v28, %v291
    %v478 = vrot.slane %v476, 2
    %v480 = vadd.f32 %v475, %v478
    %v482 = vrot.slane %v28, 3
    %v484 = vadd.f32 %v480, %v482
    %v485 = vmul.f32 %v28, %v365
    %v486 = vmul.f32 %v28, %v368
    %v488 = vrot.slane %v486, 1
    %v490 = vadd.f32 %v485, %v488
    %v491 = vmul.f32 %v28, %v375
    %v493 = vrot.slane %v491, 2
    %v495 = vadd.f32 %v490, %v493
    %v496 = vmul.f32 %v28, %v383
    %v497 = vmul.f32 %v28, %v386
    %v499 = vrot.slane %v497, 1
    %v501 = vadd.f32 %v496, %v499
    %v502 = vmul.f32 %v28, %v393
    %v504 = vrot.slane %v502, 2
    %v506 = vadd.f32 %v501, %v504
    %v507 = vmul.f32 %v28, %v401
    %v508 = vmul.f32 %v28, %v404
    %v510 = vrot.slane %v508, 1
    %v512 = vadd.f32 %v507, %v510
    %v513 = vmul.f32 %v28, %v411
    %v515 = vrot.slane %v513, 2
    %v517 = vadd.f32 %v512, %v515
    %v518 = vmul.f32 %v28, %v418
    %v519 = vmul.f32 %v28, %v421
    %v521 = vrot.slane %v519, 1
    %v523 = vadd.f32 %v518, %v521
    %v524 = vmul.f32 %v28, %v429
    %v526 = vrot.slane %v524, 2
    %v528 = vadd.f32 %v523, %v526
    %v529 = vadd.f32 %v528, %v482
    %v530 = vstv %s62
    %v531 = vmul.f32 %v530, %v484
    %v532 = vstv %s63
    %v533 = vmul.f32 %v532, %v436
    %v535 = vrot.slane %v533, 4
    %v537 = vsub.f32 %v531, %v535
    %v538 = vmul.f32 %v532, %v363
    %v539 = vstv %s61
    %v540 = vmul.f32 %v539, %v484
    %v541 = vsub.f32 %v538, %v540
    %v542 = vmul.f32 %v539, %v436
    %v543 = vmul.f32 %v530, %v363
    %v545 = vrot.slane %v543, 4
    %v547 = vsub.f32 %v542, %v545
    %v548 = vstv %s64
    %v549 = vadd.f32 %v548, %v537
    %v550 = vstv %s65
    %v551 = vadd.f32 %v550, %v541
    %v552 = vstv %s66
    %v553 = vadd.f32 %v552, %v547
    %v554 = vmul.f32 %v308, %v549
    %v556 = vrot.slane %v551, 4
    %v558 = vmul.f32 %v381, %v556
    %v560 = vrot.slane %v558, 4
    %v562 = vadd.f32 %v554, %v560
    %v564 = vrot.slane %v553, 4
    %v566 = vmul.f32 %v447, %v564
    %v567 = vadd.f32 %v562, %v566
    %v568 = vmul.f32 %v325, %v549
    %v569 = vmul.f32 %v399, %v556
    %v571 = vrot.slane %v569, 4
    %v573 = vadd.f32 %v568, %v571
    %v574 = vmul.f32 %v458, %v564
    %v575 = vadd.f32 %v573, %v574
    %v576 = vmul.f32 %v342, %v549
    %v577 = vmul.f32 %v417, %v556
    %v579 = vrot.slane %v577, 4
    %v581 = vadd.f32 %v576, %v579
    %v582 = vmul.f32 %v469, %v564
    %v583 = vadd.f32 %v581, %v582
    %v584 = vstv %s73
    %v585 = vmul.f32 %v29, %v584
    %v586 = vstv %s82
    %v587 = vmul.f32 %v29, %v586
    %v589 = vrot.slane %v587, 1
    %v591 = vadd.f32 %v585, %v589
    %v592 = vadd.f32 %v591, 1.0
    %v593 = vstv %s74
    %v594 = vmul.f32 %v29, %v593
    %v595 = vstv %s83
    %v596 = vmul.f32 %v29, %v595
    %v598 = vrot.slane %v596, 1
    %v600 = vadd.f32 %v594, %v598
    %v601 = vstv %s75
    %v602 = vmul.f32 %v29, %v601
    %v603 = vstv %s84
    %v604 = vmul.f32 %v29, %v603
    %v606 = vrot.slane %v604, 1
    %v608 = vadd.f32 %v602, %v606
    %v609 = vstv %s76
    %v610 = vmul.f32 %v29, %v609
    %v611 = vstv %s85
    %v612 = vmul.f32 %v29, %v611
    %v614 = vrot.slane %v612, 1
    %v616 = vadd.f32 %v610, %v614
    %v617 = vstv %s77
    %v618 = vmul.f32 %v29, %v617
    %v619 = vstv %s86
    %v620 = vmul.f32 %v29, %v619
    %v622 = vrot.slane %v620, 1
    %v624 = vadd.f32 %v618, %v622
    %v625 = vadd.f32 %v624, 1.0
    %v626 = vstv %s78
    %v627 = vmul.f32 %v29, %v626
    %v628 = vstv %s87
    %v629 = vmul.f32 %v29, %v628
    %v631 = vrot.slane %v629, 1
    %v633 = vadd.f32 %v627, %v631
    %v634 = vstv %s79
    %v635 = vmul.f32 %v29, %v634
    %v636 = vstv %s88
    %v637 = vmul.f32 %v29, %v636
    %v639 = vrot.slane %v637, 1
    %v641 = vadd.f32 %v635, %v639
    %v642 = vstv %s80
    %v643 = vmul.f32 %v29, %v642
    %v644 = vstv %s89
    %v645 = vmul.f32 %v29, %v644
    %v647 = vrot.slane %v645, 1
    %v649 = vadd.f32 %v643, %v647
    %v650 = vstv %s81
    %v651 = vmul.f32 %v29, %v650
    %v652 = vstv %s90
    %v653 = vmul.f32 %v29, %v652
    %v655 = vrot.slane %v653, 1
    %v657 = vadd.f32 %v651, %v655
    %v658 = vadd.f32 %v657, 1.0
    %v659 = vmul.f32 %v29, %v548
    %v660 = vstv %s67
    %v661 = vmul.f32 %v30, %v660
    %v663 = vrot.slane %v661, 1
    %v665 = vadd.f32 %v659, %v663
    %v666 = vstv %s70
    %v667 = vmul.f32 %v30, %v666
    %v669 = vrot.slane %v667, 2
    %v671 = vadd.f32 %v665, %v669
    %v672 = vmul.f32 %v29, %v550
    %v673 = vstv %s68
    %v674 = vmul.f32 %v30, %v673
    %v676 = vrot.slane %v674, 1
    %v678 = vadd.f32 %v672, %v676
    %v679 = vstv %s71
    %v680 = vmul.f32 %v30, %v679
    %v682 = vrot.slane %v680, 2
    %v684 = vadd.f32 %v678, %v682
    %v685 = vmul.f32 %v29, %v552
    %v686 = vstv %s69
    %v687 = vmul.f32 %v30, %v686
    %v689 = vrot.slane %v687, 1
    %v691 = vadd.f32 %v685, %v689
    %v692 = vstv %s72
    %v693 = vmul.f32 %v30, %v692
    %v695 = vrot.slane %v693, 2
    %v697 = vadd.f32 %v691, %v695
    %v699 = vrot.slane %v592, 5
    %v701 = vmul.f32 %v308, %v699
    %v703 = vrot.slane %v616, 5
    %v705 = vmul.f32 %v325, %v703
    %v706 = vadd.f32 %v701, %v705
    %v708 = vrot.slane %v641, 5
    %v710 = vmul.f32 %v342, %v708
    %v711 = vadd.f32 %v706, %v710
    %v713 = vrot.slane %v600, 5
    %v715 = vmul.f32 %v308, %v713
    %v717 = vrot.slane %v625, 5
    %v719 = vmul.f32 %v325, %v717
    %v720 = vadd.f32 %v715, %v719
    %v722 = vrot.slane %v649, 5
    %v724 = vmul.f32 %v342, %v722
    %v725 = vadd.f32 %v720, %v724
    %v727 = vrot.slane %v608, 5
    %v729 = vmul.f32 %v308, %v727
    %v731 = vrot.slane %v633, 5
    %v733 = vmul.f32 %v325, %v731
    %v734 = vadd.f32 %v729, %v733
    %v736 = vrot.slane %v658, 5
    %v738 = vmul.f32 %v342, %v736
    %v739 = vadd.f32 %v734, %v738
    %v741 = vrot.slane %v671, 7
    %v743 = vmul.f32 %v308, %v741
    %v745 = vrot.slane %v684, 7
    %v747 = vmul.f32 %v325, %v745
    %v748 = vadd.f32 %v743, %v747
    %v750 = vrot.slane %v697, 7
    %v752 = vmul.f32 %v342, %v750
    %v753 = vadd.f32 %v748, %v752
    %v754 = vadd.f32 %v753, %v363
    %v755 = vrot.slane %v592, 1
    %v757 = vmul.f32 %v381, %v755
    %v758 = vrot.slane %v616, 1
    %v760 = vmul.f32 %v399, %v758
    %v761 = vadd.f32 %v757, %v760
    %v762 = vrot.slane %v641, 1
    %v764 = vmul.f32 %v417, %v762
    %v765 = vadd.f32 %v761, %v764
    %v766 = vrot.slane %v600, 1
    %v768 = vmul.f32 %v381, %v766
    %v769 = vrot.slane %v625, 1
    %v771 = vmul.f32 %v399, %v769
    %v772 = vadd.f32 %v768, %v771
    %v773 = vrot.slane %v649, 1
    %v775 = vmul.f32 %v417, %v773
    %v776 = vadd.f32 %v772, %v775
    %v777 = vrot.slane %v608, 1
    %v779 = vmul.f32 %v381, %v777
    %v780 = vrot.slane %v633, 1
    %v782 = vmul.f32 %v399, %v780
    %v783 = vadd.f32 %v779, %v782
    %v784 = vrot.slane %v658, 1
    %v786 = vmul.f32 %v417, %v784
    %v787 = vadd.f32 %v783, %v786
    %v788 = vrot.slane %v671, 3
    %v790 = vmul.f32 %v381, %v788
    %v791 = vrot.slane %v684, 3
    %v793 = vmul.f32 %v399, %v791
    %v794 = vadd.f32 %v790, %v793
    %v795 = vrot.slane %v697, 3
    %v797 = vmul.f32 %v417, %v795
    %v798 = vadd.f32 %v794, %v797
    %v799 = vadd.f32 %v798, %v436
    %v800 = vmul.f32 %v447, %v699
    %v801 = vmul.f32 %v458, %v703
    %v802 = vadd.f32 %v800, %v801
    %v803 = vmul.f32 %v469, %v708
    %v804 = vadd.f32 %v802, %v803
    %v805 = vmul.f32 %v447, %v713
    %v806 = vmul.f32 %v458, %v717
    %v807 = vadd.f32 %v805, %v806
    %v808 = vmul.f32 %v469, %v722
    %v809 = vadd.f32 %v807, %v808
    %v810 = vmul.f32 %v447, %v727
    %v811 = vmul.f32 %v458, %v731
    %v812 = vadd.f32 %v810, %v811
    %v813 = vmul.f32 %v469, %v736
    %v814 = vadd.f32 %v812, %v813
    %v815 = vmul.f32 %v447, %v741
    %v816 = vmul.f32 %v458, %v745
    %v817 = vadd.f32 %v815, %v816
    %v818 = vmul.f32 %v469, %v750
    %v819 = vadd.f32 %v817, %v818
    %v820 = vadd.f32 %v819, %v484
    %v821 = vmul.f32 %v495, %v755
    %v822 = vmul.f32 %v506, %v758
    %v823 = vadd.f32 %v821, %v822
    %v824 = vmul.f32 %v517, %v762
    %v825 = vadd.f32 %v823, %v824
    %v826 = vmul.f32 %v495, %v766
    %v827 = vmul.f32 %v506, %v769
    %v828 = vadd.f32 %v826, %v827
    %v829 = vmul.f32 %v517, %v773
    %v830 = vadd.f32 %v828, %v829
    %v831 = vmul.f32 %v495, %v777
    %v832 = vmul.f32 %v506, %v780
    %v833 = vadd.f32 %v831, %v832
    %v834 = vmul.f32 %v517, %v784
    %v835 = vadd.f32 %v833, %v834
    %v836 = vmul.f32 %v495, %v788
    %v837 = vmul.f32 %v506, %v791
    %v838 = vadd.f32 %v836, %v837
    %v839 = vmul.f32 %v517, %v795
    %v840 = vadd.f32 %v838, %v839
    %v841 = vadd.f32 %v840, %v529
    %v843 = vrot.slane %v167, 5
    %v846 = vrot.slane %v172, 5
    %v849 = vrot.slane %v177, 5
    %v852 = vrot.slane %v567, 7
    %v855 = vrot.slane %v575, 6
    %v858 = vrot.slane %v583, 5
    %v861 = vrot.slane %v711, 4
    %v864 = vrot.slane %v725, 3
    %v867 = vrot.slane %v739, 2
    %v870 = vrot.slane %v754, 1
    %vm872 = vcmask 1040384
    %vm873 = vcmask 1041408
    %v874 = vsel %vm873, %v116, %v116
    %vm875 = vcmask 1042432
    %v876 = vsel %vm875, %v874, %v843
    %vm877 = vcmask 1043456
    %v878 = vsel %vm877, %v876, %v846
    %vm879 = vcmask 1044480
    %v880 = vsel %vm879, %v878, %v849
    %vm881 = vcmask 1045504
    %v882 = vsel %vm881, %v880, 0.0
    %vm883 = vcmask 1046528
    %v884 = vsel %vm883, %v882, 0.0
    %v885 = vsel %vm872, 0.0, %v852
    %v886 = vsel %vm873, %v885, %v855
    %v887 = vsel %vm875, %v886, %v858
    %v888 = vsel %vm877, %v887, %v861
    %v889 = vsel %vm879, %v888, %v864
    %v890 = vsel %vm881, %v889, %v867
    %v891 = vsel %vm883, %v890, %v870
    %v893 = vrot.slane %v765, 4
    %v896 = vrot.slane %v776, 3
    %v899 = vrot.slane %v787, 2
    %v902 = vrot.slane %v799, 1
    %v905 = vrot.slane %v804, 4
    %v908 = vrot.slane %v809, 3
    %v911 = vrot.slane %v814, 2
    %v914 = vrot.slane %v820, 1
    %v917 = vrot.slane %v825, 4
    %v920 = vrot.slane %v830, 3
    %v923 = vrot.slane %v835, 2
    %v926 = vrot.slane %v841, 1
    %v928 = vsel %vm872, %v893, %v896
    %v929 = vsel %vm873, %v928, %v899
    %v930 = vsel %vm875, %v929, %v902
    %v931 = vsel %vm877, %v930, %v905
    %v932 = vsel %vm879, %v931, %v908
    %v933 = vsel %vm881, %v932, %v911
    %v934 = vsel %vm883, %v933, %v914
    %v935 = vsel %vm872, %v917, %v920
    %v936 = vsel %vm873, %v935, %v923
    %v937 = vsel %vm875, %v936, %v926
    %938 = vst [vmem:[%s3] sm:$0xff] %v884
    %939 = vst [vmem:[%s3 + $0x8] sm:$0xff] %v891
    %940 = vst [vmem:[%s3 + $0x10] sm:$0xff] %v934
    %941 = vst [vmem:[%s3 + $0x18] sm:$0xf] %v937
    // Predicated region
    $region18: #{twist_forward.1} parent=1 // pred_check
      _
    $region19: #{twist_forward.1} parent=1 // pred_check_branch
      %943 = sbr.rel (0) target = $region21
    $region20: #{twist_forward.1} parent=1 // pred_region
      _
    $region21: #{twist_forward.1} parent=1 // pred_fallthru
      _
    // Predicated region
    $region22: #{twist_forward.1} parent=1 // pred_check
      _
    $region23: #{twist_forward.1} parent=1 // pred_check_branch
      %945 = sbr.rel (0) target = $region25
    $region24: #{twist_forward.1} parent=1 // pred_region
      _
    $region25: #{twist_forward.1} parent=1 // pred_fallthru
      _
    %946 = vsyncpa [#allocation3], 1

</llo_original>
